<compile_context>
chip_gen: v7x
topology: tpu7x:2x2x1
jax: 0.10.0
libtpu: 0.0.40
codegen_flags: <defaults>
</compile_context>

<pallas_src>
import jax
import jax.numpy as jnp
import numpy as np
from jax.experimental import pallas as pl
from jax.experimental.pallas import tpu as pltpu

MINIBATCH = 256          # fixed in the module's __init__
GROUP_TILE = 2048        # 2048 groups * 256 lanes * 4 B = 2 MiB per f32 tile


def _label_broadcast_kernel(lab_ref, o_ref):
    # lab_ref: VMEM (g_tile, 1) float32 per-group labels
    # o_ref:   VMEM (g_tile, MINIBATCH) float32 lane-dense output tile
    o_ref[...] = jnp.broadcast_to(lab_ref[...], o_ref.shape)


def instance_label_resize(x, need_backprop):
    """x: (N, C) array (values unused, only N matters).
    need_backprop: (B,) array of per-image labels.
    Returns (N, 1) float32 labels replicated per 256-instance minibatch."""
    n = int(x.shape[0])
    b = int(need_backprop.shape[0])

    # Number of 256-row groups needed to cover N (ragged tail supported:
    # the trailing reshape+slice truncates exactly like the numpy slicing
    # in the reference).
    n_groups = -(-n // MINIBATCH)

    # Tile policy: one full block when small; 2 MiB group tiles when large.
    if n_groups <= GROUP_TILE:
        g_tile = n_groups
        n_groups_pad = n_groups
    else:
        g_tile = GROUP_TILE
        n_groups_pad = -(-n_groups // g_tile) * g_tile
    grid = (n_groups_pad // g_tile,)

    # Per-group label vector: default 1.0 (matches np.ones init), first
    # min(B, n_groups_pad) entries from need_backprop.  Extra labels
    # (B*256 > N) are simply never read back after the final slice.
    lbs = need_backprop.astype(jnp.float32).reshape(-1)
    per_group = jnp.ones((n_groups_pad,), jnp.float32)
    k = min(b, n_groups_pad)
    if k > 0:
        per_group = per_group.at[:k].set(lbs[:k])
    per_group = per_group.reshape(n_groups_pad, 1)

    out = pl.pallas_call(
        _label_broadcast_kernel,
        out_shape=jax.ShapeDtypeStruct((n_groups_pad, MINIBATCH), jnp.float32),
        grid=grid,
        in_specs=[pl.BlockSpec((g_tile, 1), lambda i: (i, 0))],
        out_specs=pl.BlockSpec((g_tile, MINIBATCH), lambda i: (i, 0)),
        compiler_params=pltpu.CompilerParams(
            dimension_semantics=("parallel",),
        ),
    )(per_group)

    # Row-major (n_groups_pad, 256) -> (N, 1): free reshape + slice, identical
    # ordering to the original "one label per instance row" output.
    return out.reshape(n_groups_pad * MINIBATCH, 1)[:n]


def _reference(x, need_backprop):
    feats = np.asarray(x)
    lbs = np.asarray(need_backprop)
    ref = np.ones((feats.shape[0], 1), dtype=np.float32)
    for i in range(lbs.shape[0]):
        ref[i * MINIBATCH:(i + 1) * MINIBATCH] = lbs[i]
    return ref


if __name__ == "__main__":
    key = jax.random.PRNGKey(0)
    kx, kl, kx2 = jax.random.split(key, 3)

    B = 2                       # number of images
    N = B * MINIBATCH           # number of instances (512)
    C = 32                      # feature dim (unused by the op)

    x = jax.random.normal(kx, (N, C), dtype=jnp.float32)
    # per-image domain labels, e.g. 0.0 / 1.0
    need_backprop = (jax.random.uniform(kl, (B,)) > 0.5).astype(jnp.float32)

    y = instance_label_resize(x, need_backprop)
    y = jax.block_until_ready(y)

    assert y.shape == (N, 1) and y.dtype == jnp.float32
    np.testing.assert_allclose(np.asarray(y), _reference(x, need_backprop),
                               rtol=0, atol=0)

    # Ragged-tail case (N not a multiple of 256): reference slicing truncates.
    N2 = 300
    x2 = jax.random.normal(kx2, (N2, C), dtype=jnp.float32)
    y2 = jax.block_until_ready(instance_label_resize(x2, need_backprop))
    assert y2.shape == (N2, 1) and y2.dtype == jnp.float32
    np.testing.assert_allclose(np.asarray(y2), _reference(x2, need_backprop),
                               rtol=0, atol=0)

    print("KERNEL_OK")
</pallas_src>

<mosaic_0001>
module attributes {stable_mosaic.version = 11 : i64} {
  func.func @_label_broadcast_kernel(%arg0: i32, %arg1: memref<2x1xf32, #tpu.memory_space<vmem>>, %arg2: memref<2x256xf32, #tpu.memory_space<vmem>>) attributes {dimension_semantics = [#tpu.dimension_semantics<parallel>], iteration_bounds = array<i64: 1>, scalar_prefetch = 0 : i64, scratch_operands = 0 : i64, tpu.core_type = #tpu.core_type<tc>, window_params = [{transform_indices = @transform_0, window_bounds = array<i64: 2, 1>}, {transform_indices = @transform_1, window_bounds = array<i64: 2, 256>}]} {
    %c0 = arith.constant 0 : index
    %c0_0 = arith.constant 0 : index
    %0 = vector.load %arg1[%c0, %c0_0] : memref<2x1xf32, #tpu.memory_space<vmem>>, vector<2x1xf32>
    %1 = vector.shape_cast %0 : vector<2x1xf32> to vector<2x1xf32>
    %2 = vector.broadcast %1 : vector<2x1xf32> to vector<2x256xf32>
    %c0_1 = arith.constant 0 : index
    %c0_2 = arith.constant 0 : index
    %3 = vector.load %arg2[%c0_1, %c0_2] : memref<2x256xf32, #tpu.memory_space<vmem>>, vector<2x256xf32>
    tpu.vector_store %arg2[%c0_1, %c0_2], %2 {strides = array<i32>} : memref<2x256xf32, #tpu.memory_space<vmem>>, vector<2x256xf32>,
    return
  }
  func.func @transform_0(%arg0: i32) -> (i32, i32) {
    %c0_i32 = arith.constant 0 : i32
    %c0_i32_0 = arith.constant 0 : i32
    return %arg0, %c0_i32 : i32, i32
  }
  func.func @transform_1(%arg0: i32) -> (i32, i32) {
    %c0_i32 = arith.constant 0 : i32
    %c0_i32_0 = arith.constant 0 : i32
    return %arg0, %c0_i32 : i32, i32
  }
}

</mosaic_0001>

<llo_original>
// kernel: tpu_custom_call.1
$region0: #{tpu_custom_call.1}
  #allocation0 [shape = 'u32[]', space=smem, size = 0x4, offset = 0x4, fixed_abs, tag = 'smem constant byte address 0x4 - core index']
  #allocation1 [shape = 'u32[144,128]{1,0:T(1,128)}', space=vmem, size = 0x12000, scoped, tag = 'internal scratch']
  %s0 = inlined_call_operand.vmem [shape: f32[2,1], index: 0, kind: input, shape index: {}]
  %s1 = inlined_call_operand.hbm [shape: f32[2,256], index: 1, kind: output, shape index: {}]
  %s2 = sld [smem:[#allocation0]]
  $region14: #{tpu_custom_call.1} parent=0
    _
  %s4 = ssub.s32 1, %s2
  %s5 = scalar_select 0, %s4, %s2
  $region1: #{tpu_custom_call.1} parent=0
    #allocation2 [shape = 'u8[2048]{0}', space=vmem, size = 0x800, scoped, tag = 'output window, operand 0, single buffered']
    #allocation3 [shape = 's32[1]{0}', space=sflag, size = 0x4, scoped, tag = 'scoped memory for tpu_custom_call.1']
    %6 = vsyncpa [#allocation3], 0
    // Predicated region
    $region2: #{tpu_custom_call.1} parent=1 // pred_check
      _
    $region3: #{tpu_custom_call.1} parent=1 // pred_check_branch
      %8 = sbr.rel (0) target = $region5
    $region4: #{tpu_custom_call.1} parent=1 // pred_region
      _
    $region5: #{tpu_custom_call.1} parent=1 // pred_fallthru
      _
    %v9 = vld [vmem:[%s0] sm:$0x3]
    %11 = vset.pattern.permute.xlu0 0
    %12 = vperm.xlu0 %11, %v9
    %v13 = vpop.permute.xlu0 %12
    %v15 = vunpack.c.l.s4 269488144
    %v16 = vunpack.c.0.s8 %v15
    %v17 = vlaneseq
    %v18 = vshrl.u32 %v17, 7
    %v19 = vsub.s32 %v16, %v18
    %v20 = vrot.slane %v13, %v19
    %22 = vst [vmem:[#allocation2] sm:$0xf] %v20
    // Predicated region
    $region6: #{tpu_custom_call.1} parent=1 // pred_check
      _
    $region7: #{tpu_custom_call.1} parent=1 // pred_check_branch
      %24 = sbr.rel (0) target = $region9
    $region8: #{tpu_custom_call.1} parent=1 // pred_region
      %s26 = ssub.s32 64, 64
      %27 = vsyncadd [#allocation3], %s26
      %s29 = sshll.u32 [#allocation2], 4
      %s30 = int_to_ptr.vmem [resolvable:$true] %s29
      %32 = dma.vmem_to_hbm [thread:$0]  %s30, 64, %s1, [#allocation3]
    $region9: #{tpu_custom_call.1} parent=1 // pred_fallthru
      _
    // Predicated region
    $region10: #{tpu_custom_call.1} parent=1 // pred_check
      _
    $region11: #{tpu_custom_call.1} parent=1 // pred_check_branch
      %34 = sbr.rel (0) target = $region13
    $region12: #{tpu_custom_call.1} parent=1 // pred_region
      %35 = dma.done [#allocation3], 64
    $region13: #{tpu_custom_call.1} parent=1 // pred_fallthru
      _
    %36 = vsyncpa [#allocation3], 1

</llo_original>
